<compile_context>
chip_gen: v6e
topology: v6e:2x2x1
jax: 0.10.0
libtpu: 0.0.40
codegen_flags: <defaults>
</compile_context>

<pallas_src>
import functools

import jax
import jax.numpy as jnp
from jax.experimental import pallas as pl
from jax.experimental.pallas import tpu as pltpu


def _round_up(x, m):
    return (x + m - 1) // m * m


# ----------------------------------------------------------------------------
# Kernels
# ----------------------------------------------------------------------------
def _recurrence_block(xw_ref, whh_ref, h_sc, c_sc, *, seq_len, mask_tail,
                      unroll):
    """LSTM recurrence over one (batch-tile, time-block) grid step.

    xw_ref : (T_BLK, B_TILE, 4H) f32  precomputed x@W_ih^T + bias (lane-dense)
    whh_ref: (H, 4H) bf16             fused [i|f|g|o] recurrent weights
    h_sc, c_sc: (B_TILE, H) f32 VMEM scratch carrying the recurrent state.
    Returns the hidden state (value) after the last timestep of this block.
    """
    bt, hdim = h_sc.shape
    t_steps = xw_ref.shape[0]
    tb = pl.program_id(1)                 # time axis = inner 'arbitrary' axis

    @pl.when(tb == 0)
    def _():
        h_sc[...] = jnp.zeros_like(h_sc)
        c_sc[...] = jnp.zeros_like(c_sc)

    whh = whh_ref[...]                    # hoisted out of the per-step loop

    def step(t, carry):
        h, c = carry                                             # (B, H) f32
        # Only the recurrent matmul remains on the serial critical path.
        gates = xw_ref[t] + jnp.dot(h.astype(whh.dtype), whh,
                                    preferred_element_type=jnp.float32)
        # Whole-slab activations: 2 EUP pushes on the full (B, 4H) vreg slab.
        sig = jax.nn.sigmoid(gates)
        tnh = jnp.tanh(gates)
        i_g = sig[:, 0 * hdim:1 * hdim]
        f_g = sig[:, 1 * hdim:2 * hdim]
        g_g = tnh[:, 2 * hdim:3 * hdim]
        o_g = sig[:, 3 * hdim:4 * hdim]
        c_new = f_g * c + i_g * g_g
        h_new = o_g * jnp.tanh(c_new)
        if mask_tail:                     # static: only when S was padded up
            valid = (tb * t_steps + t) < seq_len
            h_new = jnp.where(valid, h_new, h)
            c_new = jnp.where(valid, c_new, c)
        return h_new, c_new

    h, c = jax.lax.fori_loop(0, t_steps, step, (h_sc[...], c_sc[...]),
                             unroll=unroll)
    h_sc[...] = h
    c_sc[...] = c
    return h


def lstm_fused_fc_kernel(xw_ref, whh_ref, wfc_ref, bfc_ref, out_ref,
                         h_sc, c_sc, *, seq_len, mask_tail, unroll):
    """Recurrence + FC head fused on the last time block (small/medium V)."""
    h = _recurrence_block(xw_ref, whh_ref, h_sc, c_sc, seq_len=seq_len,
                          mask_tail=mask_tail, unroll=unroll)

    @pl.when(pl.program_id(1) == pl.num_programs(1) - 1)
    def _():
        logits = (jnp.dot(h.astype(wfc_ref.dtype), wfc_ref[...],
                          preferred_element_type=jnp.float32) + bfc_ref[...])
        out_ref[...] = logits.astype(out_ref.dtype)


def lstm_hidden_kernel(xw_ref, whh_ref, h_out_ref, h_sc, c_sc,
                       *, seq_len, mask_tail, unroll):
    """Recurrence only; emits the last hidden state (large-vocab fallback)."""
    h = _recurrence_block(xw_ref, whh_ref, h_sc, c_sc, seq_len=seq_len,
                          mask_tail=mask_tail, unroll=unroll)

    @pl.when(pl.program_id(1) == pl.num_programs(1) - 1)
    def _():
        h_out_ref[...] = h.astype(h_out_ref.dtype)


def fc_kernel(h_ref, wfc_ref, bfc_ref, out_ref):
    """Final Linear: (B, H) @ (H, V_TILE) + bias, lane-dense over V."""
    out_ref[...] = (jnp.dot(h_ref[...], wfc_ref[...],
                            preferred_element_type=jnp.float32)
                    + bfc_ref[...]).astype(out_ref.dtype)


# ----------------------------------------------------------------------------
# Wrapper
# ----------------------------------------------------------------------------
def lstm_model_forward(tokens, params, *, single_buffer_weights=False,
                       fc_fuse_max_vp=4096):
    """tokens: int32 (B, S). Returns logits (B, V) float32."""
    emb = params["embedding"]            # (V, E)
    w_ih = params["w_ih"]                # (4H, E)  PyTorch layout, rows i|f|g|o
    w_hh = params["w_hh"]                # (4H, H)
    b_ih = params["b_ih"]                # (4H,)
    b_hh = params["b_hh"]                # (4H,)
    w_fc = params["w_fc"]                # (V, H)
    b_fc = params["b_fc"]                # (V,)

    B, S = tokens.shape
    V, E = emb.shape
    H = w_hh.shape[1]

    # ---- batch tiling (sublane dim): pad to 8; when >=16 rows, split into
    # >=2 'parallel' tiles so both v7x TensorCores get work. ------------------
    bp8 = _round_up(B, 8)
    if bp8 >= 16:
        b_tile = min(_round_up(bp8 // 2, 8), 256)
    else:
        b_tile = bp8
    Bp = _round_up(bp8, b_tile)

    # ---- time blocking: multiple of the unroll factor, capped by a VMEM
    # budget (double-buffered xw block) and 32 steps; pad S and mask the tail.
    vmem_budget = 4 << 20                 # conservative vs v7x 32 MiB scoped default
    per_step_bytes = 2 * b_tile * 4 * H * 4
    cap = int(max(1, min(32, vmem_budget // max(per_step_bytes, 1))))
    if cap >= 8:
        cap = cap // 8 * 8
        n_t = pl.cdiv(S, cap)
        t_blk = min(_round_up(pl.cdiv(S, n_t), 8), cap)
        unroll = 8
    else:
        t_blk = min(S, cap)
        unroll = t_blk
    S_pad = _round_up(S, t_blk)
    mask_tail = S_pad != S

    # ---- glue (plain JAX): bf16 embedding gather with the (B,S)->(S,B)
    # layout folded in, then the whole-sequence input projection as ONE
    # time-parallel MXU matmul with the bias folded in (off the serial path).
    # TODO(synk): the data-dependent embedding row gather stays in XLA; a DMA
    # gather kernel is not worthwhile at these sizes.
    wih_t = w_ih.T.astype(jnp.bfloat16)                  # (E, 4H)
    whh_t = w_hh.T.astype(jnp.bfloat16)                  # (H, 4H)
    bias = (b_ih + b_hh).reshape(1, 4 * H).astype(jnp.float32)

    x_tm = emb.astype(jnp.bfloat16)[tokens.T]            # (S, B, E) bf16
    xw = jnp.einsum("sbe,ef->sbf", x_tm, wih_t,
                    preferred_element_type=jnp.float32) + bias   # (S, B, 4H)
    xw = jnp.pad(xw, ((0, S_pad - S), (0, Bp - B), (0, 0)))      # (S_pad, Bp, 4H)

    def const2d(shape):
        # Constant-index weight blocks are never re-fetched; optionally
        # single-buffer them (saves one full weight copy in VMEM -- decisive
        # for large H on v7x's 64 MiB VMEM, irrelevant at toy sizes).
        kwargs = {}
        if single_buffer_weights:
            kwargs["pipeline_mode"] = pl.Buffered(1)
        return pl.BlockSpec(shape, lambda b, t: (0, 0), **kwargs)

    grid = (Bp // b_tile, S_pad // t_blk)        # (batch tiles, time blocks)
    xw_spec = pl.BlockSpec((t_blk, b_tile, 4 * H), lambda b, t: (t, b, 0))
    lstm_scratch = [
        pltpu.VMEM((b_tile, H), jnp.float32),    # h state
        pltpu.VMEM((b_tile, H), jnp.float32),    # c state
    ]
    cparams = pltpu.CompilerParams(
        dimension_semantics=("parallel", "arbitrary"))

    Vp = _round_up(V, 128)
    if Vp <= fc_fuse_max_vp:
        # ---- FC head fused into the last time block of the LSTM kernel -----
        wfc_t = jnp.pad(w_fc.T, ((0, 0), (0, Vp - V))).astype(jnp.bfloat16)
        bfc = jnp.pad(b_fc, (0, Vp - V)).reshape(1, Vp).astype(jnp.float32)

        kernel = functools.partial(lstm_fused_fc_kernel, seq_len=S,
                                   mask_tail=mask_tail, unroll=unroll)
        logits_p = pl.pallas_call(
            kernel,
            out_shape=jax.ShapeDtypeStruct((Bp, Vp), jnp.float32),
            grid_spec=pltpu.PrefetchScalarGridSpec(
                num_scalar_prefetch=0,
                grid=grid,
                in_specs=[
                    xw_spec,                     # x @ W_ih^T + bias (lane-dense)
                    const2d((H, 4 * H)),         # W_hh^T
                    const2d((H, Vp)),            # W_fc^T
                    const2d((1, Vp)),            # b_fc
                ],
                out_specs=pl.BlockSpec((b_tile, Vp), lambda b, t: (b, 0)),
                scratch_shapes=lstm_scratch,
            ),
            compiler_params=cparams,
        )(xw, whh_t, wfc_t, bfc)
        return logits_p[:B, :V]

    # ---- large-vocab fallback: recurrence kernel -> lane-dense FC kernel ----
    kernel = functools.partial(lstm_hidden_kernel, seq_len=S,
                               mask_tail=mask_tail, unroll=unroll)
    h_last = pl.pallas_call(
        kernel,
        out_shape=jax.ShapeDtypeStruct((Bp, H), jnp.float32),
        grid_spec=pltpu.PrefetchScalarGridSpec(
            num_scalar_prefetch=0,
            grid=grid,
            in_specs=[xw_spec, const2d((H, 4 * H))],
            out_specs=pl.BlockSpec((b_tile, H), lambda b, t: (b, 0)),
            scratch_shapes=lstm_scratch,
        ),
        compiler_params=cparams,
    )(xw, whh_t)

    v_tile = 128 if V <= 128 else 512
    Vp = _round_up(V, v_tile)
    wfc_t = jnp.pad(w_fc.T, ((0, 0), (0, Vp - V))).astype(jnp.bfloat16)
    bfc = jnp.pad(b_fc, (0, Vp - V)).reshape(1, Vp).astype(jnp.float32)
    logits_p = pl.pallas_call(
        fc_kernel,
        out_shape=jax.ShapeDtypeStruct((Bp, Vp), jnp.float32),
        grid_spec=pltpu.PrefetchScalarGridSpec(
            num_scalar_prefetch=0,
            grid=(Vp // v_tile,),
            in_specs=[
                pl.BlockSpec((Bp, H), lambda j: (0, 0)),
                pl.BlockSpec((H, v_tile), lambda j: (0, j)),
                pl.BlockSpec((1, v_tile), lambda j: (0, j)),
            ],
            out_specs=pl.BlockSpec((Bp, v_tile), lambda j: (0, j)),
        ),
        compiler_params=pltpu.CompilerParams(
            dimension_semantics=("parallel",)),
    )(h_last.astype(jnp.bfloat16), wfc_t, bfc)
    return logits_p[:B, :V]


# ----------------------------------------------------------------------------
# Pure-JAX reference (mirrors the PyTorch module)
# ----------------------------------------------------------------------------
def reference_forward(tokens, params, matmul_dtype=jnp.float32):
    """matmul_dtype=float32  -> exact PyTorch-semantics reference.
       matmul_dtype=bfloat16 -> numerics-matched to the kernel (bf16 MXU
                                operands, f32 accumulation/state/activations)."""
    emb = params["embedding"]
    w_ih, w_hh = params["w_ih"], params["w_hh"]
    b_ih, b_hh = params["b_ih"], params["b_hh"]
    w_fc, b_fc = params["w_fc"], params["b_fc"]
    H = w_hh.shape[1]

    x = emb[tokens].astype(matmul_dtype)                 # (B, S, E)
    wih = w_ih.T.astype(matmul_dtype)                    # (E, 4H)
    whh = w_hh.T.astype(matmul_dtype)                    # (H, 4H)
    bias = (b_ih + b_hh).astype(jnp.float32)             # (4H,)
    B = x.shape[0]
    h = jnp.zeros((B, H), jnp.float32)
    c = jnp.zeros((B, H), jnp.float32)

    def step(carry, x_t):
        h, c = carry
        gates = (jnp.dot(x_t, wih, preferred_element_type=jnp.float32)
                 + jnp.dot(h.astype(matmul_dtype), whh,
                           preferred_element_type=jnp.float32)
                 + bias)
        i = jax.nn.sigmoid(gates[:, :H])
        f = jax.nn.sigmoid(gates[:, H:2 * H])
        g = jnp.tanh(gates[:, 2 * H:3 * H])
        o = jax.nn.sigmoid(gates[:, 3 * H:])
        c = f * c + i * g
        h = o * jnp.tanh(c)
        return (h, c), None

    (h, c), _ = jax.lax.scan(step, (h, c), jnp.transpose(x, (1, 0, 2)))
    logits = jnp.dot(h.astype(matmul_dtype), w_fc.T.astype(matmul_dtype),
                     preferred_element_type=jnp.float32) + b_fc
    return logits


def init_params(key, vocab_size, embed_size, hidden_size):
    ks = jax.random.split(key, 7)
    k = 1.0 / jnp.sqrt(hidden_size)
    u = lambda kk, shape, s: jax.random.uniform(kk, shape, jnp.float32, -s, s)
    return {
        "embedding": jax.random.normal(ks[0], (vocab_size, embed_size), jnp.float32),
        "w_ih": u(ks[1], (4 * hidden_size, embed_size), k),
        "w_hh": u(ks[2], (4 * hidden_size, hidden_size), k),
        "b_ih": u(ks[3], (4 * hidden_size,), k),
        "b_hh": u(ks[4], (4 * hidden_size,), k),
        "w_fc": u(ks[5], (vocab_size, hidden_size), k),
        "b_fc": u(ks[6], (vocab_size,), k),
    }


if __name__ == "__main__":
    vocab_size, embed_size, hidden_size, seq_length = 32, 16, 32, 8
    batch = 2

    key = jax.random.PRNGKey(0)
    pkey, tkey = jax.random.split(key)
    params = init_params(pkey, vocab_size, embed_size, hidden_size)
    tokens = jax.random.randint(tkey, (batch, seq_length), 0, vocab_size, jnp.int32)

    fwd = jax.jit(lstm_model_forward)
    out = jax.block_until_ready(fwd(tokens, params))
    assert out.shape == (batch, vocab_size)

    # Tight check vs. a numerics-matched (bf16 MXU operand, f32 accum) reference.
    ref_matched = reference_forward(tokens, params, matmul_dtype=jnp.bfloat16)
    assert jnp.allclose(out, ref_matched, atol=1e-2, rtol=1e-2), (
        float(jnp.max(jnp.abs(out - ref_matched))))

    # Looser sanity check vs. the full-f32 PyTorch-semantics reference.
    ref_f32 = reference_forward(tokens, params, matmul_dtype=jnp.float32)
    assert jnp.allclose(out, ref_f32, atol=5e-2, rtol=5e-2), (
        float(jnp.max(jnp.abs(out - ref_f32))))

    # Exercise the padded/masked-time path (S not a multiple of t_blk) and
    # batch padding (B not a multiple of 8).
    tokens2 = jax.random.randint(jax.random.PRNGKey(1), (3, 37), 0,
                                 vocab_size, jnp.int32)
    out2 = jax.block_until_ready(fwd(tokens2, params))
    ref2 = reference_forward(tokens2, params, matmul_dtype=jnp.bfloat16)
    assert out2.shape == (3, vocab_size)
    assert jnp.allclose(out2, ref2, atol=2e-2, rtol=2e-2), (
        float(jnp.max(jnp.abs(out2 - ref2))))

    # Exercise the large-vocab fallback path (separate lane-dense FC kernel).
    out3 = jax.block_until_ready(
        jax.jit(functools.partial(lstm_model_forward, fc_fuse_max_vp=0))(
            tokens, params))
    assert jnp.allclose(out3, out, atol=1e-4, rtol=1e-4), (
        float(jnp.max(jnp.abs(out3 - out))))

    print("KERNEL_OK")
</pallas_src>

<mosaic_0001>
module attributes {stable_mosaic.version = 11 : i64} {
  func.func @lstm_fused_fc_kernel(%arg0: i32, %arg1: i32, %arg2: memref<8x8x128xf32, #tpu.memory_space<vmem>>, %arg3: memref<32x128xbf16, #tpu.memory_space<vmem>>, %arg4: memref<32x128xbf16, #tpu.memory_space<vmem>>, %arg5: memref<1x128xf32, #tpu.memory_space<vmem>>, %arg6: memref<8x128xf32, #tpu.memory_space<vmem>>, %arg7: memref<8x32xf32, #tpu.memory_space<vmem>>, %arg8: memref<8x32xf32, #tpu.memory_space<vmem>>) attributes {dimension_semantics = [#tpu.dimension_semantics<parallel>, #tpu.dimension_semantics<arbitrary>], iteration_bounds = array<i64: 1, 1>, scalar_prefetch = 0 : i64, scratch_operands = 2 : i64, tpu.core_type = #tpu.core_type<tc>, window_params = [{transform_indices = @transform_0, window_bounds = array<i64: 8, 8, 128>}, {pipeline_mode = #tpu.pipeline_mode<synchronous>, transform_indices = @transform_1, window_bounds = array<i64: 32, 128>}, {pipeline_mode = #tpu.pipeline_mode<synchronous>, transform_indices = @transform_2, window_bounds = array<i64: 32, 128>}, {pipeline_mode = #tpu.pipeline_mode<synchronous>, transform_indices = @transform_3, window_bounds = array<i64: 1, 128>}, {transform_indices = @transform_4, window_bounds = array<i64: 8, 128>}]} {
    %c0_i32 = arith.constant 0 : i32
    %0 = arith.cmpi eq, %arg1, %c0_i32 : i32
    %1 = arith.extui %0 : i1 to i32
    %c0_i32_0 = arith.constant 0 : i32
    %2 = arith.cmpi ne, %1, %c0_i32_0 : i32
    scf.if %2 {
      %cst_44 = arith.constant 0.000000e+00 : f32
      %179 = vector.broadcast %cst_44 : f32 to vector<8x32xf32>
      %c0_45 = arith.constant 0 : index
      %c0_46 = arith.constant 0 : index
      %180 = vector.load %arg7[%c0_45, %c0_46] : memref<8x32xf32, #tpu.memory_space<vmem>>, vector<8x32xf32>
      tpu.vector_store %arg7[%c0_45, %c0_46], %179 {strides = array<i32>} : memref<8x32xf32, #tpu.memory_space<vmem>>, vector<8x32xf32>,
      %cst_47 = arith.constant 0.000000e+00 : f32
      %181 = vector.broadcast %cst_47 : f32 to vector<8x32xf32>
      %c0_48 = arith.constant 0 : index
      %c0_49 = arith.constant 0 : index
      %182 = vector.load %arg8[%c0_48, %c0_49] : memref<8x32xf32, #tpu.memory_space<vmem>>, vector<8x32xf32>
      tpu.vector_store %arg8[%c0_48, %c0_49], %181 {strides = array<i32>} : memref<8x32xf32, #tpu.memory_space<vmem>>, vector<8x32xf32>,
    } else {
    }
    %c0 = arith.constant 0 : index
    %c0_1 = arith.constant 0 : index
    %3 = vector.load %arg3[%c0, %c0_1] : memref<32x128xbf16, #tpu.memory_space<vmem>>, vector<32x128xbf16>
    %c0_2 = arith.constant 0 : index
    %c0_3 = arith.constant 0 : index
    %4 = vector.load %arg7[%c0_2, %c0_3] : memref<8x32xf32, #tpu.memory_space<vmem>>, vector<8x32xf32>
    %c0_4 = arith.constant 0 : index
    %c0_5 = arith.constant 0 : index
    %5 = vector.load %arg8[%c0_4, %c0_5] : memref<8x32xf32, #tpu.memory_space<vmem>>, vector<8x32xf32>
    %c0_i32_6 = arith.constant 0 : i32
    %6 = arith.index_cast %c0_i32_6 : i32 to index
    %c0_7 = arith.constant 0 : index
    %c0_8 = arith.constant 0 : index
    %7 = vector.load %arg2[%6, %c0_7, %c0_8] : memref<8x8x128xf32, #tpu.memory_space<vmem>>, vector<1x8x128xf32>
    %8 = vector.shape_cast %7 : vector<1x8x128xf32> to vector<8x128xf32>
    %9 = arith.truncf %4 : vector<8x32xf32> to vector<8x32xbf16>
    %cst = arith.constant dense<0.000000e+00> : vector<8x128xf32>
    %10 = tpu.matmul %9, %3, %cst {dimension_numbers = #tpu.dot_dimension_numbers<[1], [0], [0], [1], [0, 0, 1, 1], [], []>} : vector<8x32xbf16>, vector<32x128xbf16>, vector<8x128xf32> -> vector<8x128xf32>
    %11 = arith.addf %8, %10 : vector<8x128xf32>
    %12 = arith.negf %11 : vector<8x128xf32>
    %13 = math.exp %12 : vector<8x128xf32>
    %cst_9 = arith.constant 1.000000e+00 : f32
    %14 = vector.broadcast %cst_9 : f32 to vector<8x128xf32>
    %15 = arith.addf %14, %13 : vector<8x128xf32>
    %16 = arith.divf %14, %15 : vector<8x128xf32>
    %17 = math.tanh %11 : vector<8x128xf32>
    %18 = vector.extract_strided_slice %16 {offsets = [0, 0], sizes = [8, 32], strides = [1, 1]} : vector<8x128xf32> to vector<8x32xf32>
    %19 = vector.extract_strided_slice %16 {offsets = [0, 32], sizes = [8, 32], strides = [1, 1]} : vector<8x128xf32> to vector<8x32xf32>
    %20 = vector.extract_strided_slice %17 {offsets = [0, 64], sizes = [8, 32], strides = [1, 1]} : vector<8x128xf32> to vector<8x32xf32>
    %21 = vector.extract_strided_slice %16 {offsets = [0, 96], sizes = [8, 32], strides = [1, 1]} : vector<8x128xf32> to vector<8x32xf32>
    %22 = arith.mulf %19, %5 : vector<8x32xf32>
    %23 = arith.mulf %18, %20 : vector<8x32xf32>
    %24 = arith.addf %22, %23 : vector<8x32xf32>
    %25 = math.tanh %24 : vector<8x32xf32>
    %26 = arith.mulf %21, %25 : vector<8x32xf32>
    %c1_i32 = arith.constant 1 : i32
    %27 = arith.index_cast %c1_i32 : i32 to index
    %c0_10 = arith.constant 0 : index
    %c0_11 = arith.constant 0 : index
    %28 = vector.load %arg2[%27, %c0_10, %c0_11] : memref<8x8x128xf32, #tpu.memory_space<vmem>>, vector<1x8x128xf32>
    %29 = vector.shape_cast %28 : vector<1x8x128xf32> to vector<8x128xf32>
    %30 = arith.truncf %26 : vector<8x32xf32> to vector<8x32xbf16>
    %cst_12 = arith.constant dense<0.000000e+00> : vector<8x128xf32>
    %31 = tpu.matmul %30, %3, %cst_12 {dimension_numbers = #tpu.dot_dimension_numbers<[1], [0], [0], [1], [0, 0, 1, 1], [], []>} : vector<8x32xbf16>, vector<32x128xbf16>, vector<8x128xf32> -> vector<8x128xf32>
    %32 = arith.addf %29, %31 : vector<8x128xf32>
    %33 = arith.negf %32 : vector<8x128xf32>
    %34 = math.exp %33 : vector<8x128xf32>
    %cst_13 = arith.constant 1.000000e+00 : f32
    %35 = vector.broadcast %cst_13 : f32 to vector<8x128xf32>
    %36 = arith.addf %35, %34 : vector<8x128xf32>
    %37 = arith.divf %35, %36 : vector<8x128xf32>
    %38 = math.tanh %32 : vector<8x128xf32>
    %39 = vector.extract_strided_slice %37 {offsets = [0, 0], sizes = [8, 32], strides = [1, 1]} : vector<8x128xf32> to vector<8x32xf32>
    %40 = vector.extract_strided_slice %37 {offsets = [0, 32], sizes = [8, 32], strides = [1, 1]} : vector<8x128xf32> to vector<8x32xf32>
    %41 = vector.extract_strided_slice %38 {offsets = [0, 64], sizes = [8, 32], strides = [1, 1]} : vector<8x128xf32> to vector<8x32xf32>
    %42 = vector.extract_strided_slice %37 {offsets = [0, 96], sizes = [8, 32], strides = [1, 1]} : vector<8x128xf32> to vector<8x32xf32>
    %43 = arith.mulf %40, %24 : vector<8x32xf32>
    %44 = arith.mulf %39, %41 : vector<8x32xf32>
    %45 = arith.addf %43, %44 : vector<8x32xf32>
    %46 = math.tanh %45 : vector<8x32xf32>
    %47 = arith.mulf %42, %46 : vector<8x32xf32>
    %c2_i32 = arith.constant 2 : i32
    %48 = arith.index_cast %c2_i32 : i32 to index
    %c0_14 = arith.constant 0 : index
    %c0_15 = arith.constant 0 : index
    %49 = vector.load %arg2[%48, %c0_14, %c0_15] : memref<8x8x128xf32, #tpu.memory_space<vmem>>, vector<1x8x128xf32>
    %50 = vector.shape_cast %49 : vector<1x8x128xf32> to vector<8x128xf32>
    %51 = arith.truncf %47 : vector<8x32xf32> to vector<8x32xbf16>
    %cst_16 = arith.constant dense<0.000000e+00> : vector<8x128xf32>
    %52 = tpu.matmul %51, %3, %cst_16 {dimension_numbers = #tpu.dot_dimension_numbers<[1], [0], [0], [1], [0, 0, 1, 1], [], []>} : vector<8x32xbf16>, vector<32x128xbf16>, vector<8x128xf32> -> vector<8x128xf32>
    %53 = arith.addf %50, %52 : vector<8x128xf32>
    %54 = arith.negf %53 : vector<8x128xf32>
    %55 = math.exp %54 : vector<8x128xf32>
    %cst_17 = arith.constant 1.000000e+00 : f32
    %56 = vector.broadcast %cst_17 : f32 to vector<8x128xf32>
    %57 = arith.addf %56, %55 : vector<8x128xf32>
    %58 = arith.divf %56, %57 : vector<8x128xf32>
    %59 = math.tanh %53 : vector<8x128xf32>
    %60 = vector.extract_strided_slice %58 {offsets = [0, 0], sizes = [8, 32], strides = [1, 1]} : vector<8x128xf32> to vector<8x32xf32>
    %61 = vector.extract_strided_slice %58 {offsets = [0, 32], sizes = [8, 32], strides = [1, 1]} : vector<8x128xf32> to vector<8x32xf32>
    %62 = vector.extract_strided_slice %59 {offsets = [0, 64], sizes = [8, 32], strides = [1, 1]} : vector<8x128xf32> to vector<8x32xf32>
    %63 = vector.extract_strided_slice %58 {offsets = [0, 96], sizes = [8, 32], strides = [1, 1]} : vector<8x128xf32> to vector<8x32xf32>
    %64 = arith.mulf %61, %45 : vector<8x32xf32>
    %65 = arith.mulf %60, %62 : vector<8x32xf32>
    %66 = arith.addf %64, %65 : vector<8x32xf32>
    %67 = math.tanh %66 : vector<8x32xf32>
    %68 = arith.mulf %63, %67 : vector<8x32xf32>
    %c3_i32 = arith.constant 3 : i32
    %69 = arith.index_cast %c3_i32 : i32 to index
    %c0_18 = arith.constant 0 : index
    %c0_19 = arith.constant 0 : index
    %70 = vector.load %arg2[%69, %c0_18, %c0_19] : memref<8x8x128xf32, #tpu.memory_space<vmem>>, vector<1x8x128xf32>
    %71 = vector.shape_cast %70 : vector<1x8x128xf32> to vector<8x128xf32>
    %72 = arith.truncf %68 : vector<8x32xf32> to vector<8x32xbf16>
    %cst_20 = arith.constant dense<0.000000e+00> : vector<8x128xf32>
    %73 = tpu.matmul %72, %3, %cst_20 {dimension_numbers = #tpu.dot_dimension_numbers<[1], [0], [0], [1], [0, 0, 1, 1], [], []>} : vector<8x32xbf16>, vector<32x128xbf16>, vector<8x128xf32> -> vector<8x128xf32>
    %74 = arith.addf %71, %73 : vector<8x128xf32>
    %75 = arith.negf %74 : vector<8x128xf32>
    %76 = math.exp %75 : vector<8x128xf32>
    %cst_21 = arith.constant 1.000000e+00 : f32
    %77 = vector.broadcast %cst_21 : f32 to vector<8x128xf32>
    %78 = arith.addf %77, %76 : vector<8x128xf32>
    %79 = arith.divf %77, %78 : vector<8x128xf32>
    %80 = math.tanh %74 : vector<8x128xf32>
    %81 = vector.extract_strided_slice %79 {offsets = [0, 0], sizes = [8, 32], strides = [1, 1]} : vector<8x128xf32> to vector<8x32xf32>
    %82 = vector.extract_strided_slice %79 {offsets = [0, 32], sizes = [8, 32], strides = [1, 1]} : vector<8x128xf32> to vector<8x32xf32>
    %83 = vector.extract_strided_slice %80 {offsets = [0, 64], sizes = [8, 32], strides = [1, 1]} : vector<8x128xf32> to vector<8x32xf32>
    %84 = vector.extract_strided_slice %79 {offsets = [0, 96], sizes = [8, 32], strides = [1, 1]} : vector<8x128xf32> to vector<8x32xf32>
    %85 = arith.mulf %82, %66 : vector<8x32xf32>
    %86 = arith.mulf %81, %83 : vector<8x32xf32>
    %87 = arith.addf %85, %86 : vector<8x32xf32>
    %88 = math.tanh %87 : vector<8x32xf32>
    %89 = arith.mulf %84, %88 : vector<8x32xf32>
    %c4_i32 = arith.constant 4 : i32
    %90 = arith.index_cast %c4_i32 : i32 to index
    %c0_22 = arith.constant 0 : index
    %c0_23 = arith.constant 0 : index
    %91 = vector.load %arg2[%90, %c0_22, %c0_23] : memref<8x8x128xf32, #tpu.memory_space<vmem>>, vector<1x8x128xf32>
    %92 = vector.shape_cast %91 : vector<1x8x128xf32> to vector<8x128xf32>
    %93 = arith.truncf %89 : vector<8x32xf32> to vector<8x32xbf16>
    %cst_24 = arith.constant dense<0.000000e+00> : vector<8x128xf32>
    %94 = tpu.matmul %93, %3, %cst_24 {dimension_numbers = #tpu.dot_dimension_numbers<[1], [0], [0], [1], [0, 0, 1, 1], [], []>} : vector<8x32xbf16>, vector<32x128xbf16>, vector<8x128xf32> -> vector<8x128xf32>
    %95 = arith.addf %92, %94 : vector<8x128xf32>
    %96 = arith.negf %95 : vector<8x128xf32>
    %97 = math.exp %96 : vector<8x128xf32>
    %cst_25 = arith.constant 1.000000e+00 : f32
    %98 = vector.broadcast %cst_25 : f32 to vector<8x128xf32>
    %99 = arith.addf %98, %97 : vector<8x128xf32>
    %100 = arith.divf %98, %99 : vector<8x128xf32>
    %101 = math.tanh %95 : vector<8x128xf32>
    %102 = vector.extract_strided_slice %100 {offsets = [0, 0], sizes = [8, 32], strides = [1, 1]} : vector<8x128xf32> to vector<8x32xf32>
    %103 = vector.extract_strided_slice %100 {offsets = [0, 32], sizes = [8, 32], strides = [1, 1]} : vector<8x128xf32> to vector<8x32xf32>
    %104 = vector.extract_strided_slice %101 {offsets = [0, 64], sizes = [8, 32], strides = [1, 1]} : vector<8x128xf32> to vector<8x32xf32>
    %105 = vector.extract_strided_slice %100 {offsets = [0, 96], sizes = [8, 32], strides = [1, 1]} : vector<8x128xf32> to vector<8x32xf32>
    %106 = arith.mulf %103, %87 : vector<8x32xf32>
    %107 = arith.mulf %102, %104 : vector<8x32xf32>
    %108 = arith.addf %106, %107 : vector<8x32xf32>
    %109 = math.tanh %108 : vector<8x32xf32>
    %110 = arith.mulf %105, %109 : vector<8x32xf32>
    %c5_i32 = arith.constant 5 : i32
    %111 = arith.index_cast %c5_i32 : i32 to index
    %c0_26 = arith.constant 0 : index
    %c0_27 = arith.constant 0 : index
    %112 = vector.load %arg2[%111, %c0_26, %c0_27] : memref<8x8x128xf32, #tpu.memory_space<vmem>>, vector<1x8x128xf32>
    %113 = vector.shape_cast %112 : vector<1x8x128xf32> to vector<8x128xf32>
    %114 = arith.truncf %110 : vector<8x32xf32> to vector<8x32xbf16>
    %cst_28 = arith.constant dense<0.000000e+00> : vector<8x128xf32>
    %115 = tpu.matmul %114, %3, %cst_28 {dimension_numbers = #tpu.dot_dimension_numbers<[1], [0], [0], [1], [0, 0, 1, 1], [], []>} : vector<8x32xbf16>, vector<32x128xbf16>, vector<8x128xf32> -> vector<8x128xf32>
    %116 = arith.addf %113, %115 : vector<8x128xf32>
    %117 = arith.negf %116 : vector<8x128xf32>
    %118 = math.exp %117 : vector<8x128xf32>
    %cst_29 = arith.constant 1.000000e+00 : f32
    %119 = vector.broadcast %cst_29 : f32 to vector<8x128xf32>
    %120 = arith.addf %119, %118 : vector<8x128xf32>
    %121 = arith.divf %119, %120 : vector<8x128xf32>
    %122 = math.tanh %116 : vector<8x128xf32>
    %123 = vector.extract_strided_slice %121 {offsets = [0, 0], sizes = [8, 32], strides = [1, 1]} : vector<8x128xf32> to vector<8x32xf32>
    %124 = vector.extract_strided_slice %121 {offsets = [0, 32], sizes = [8, 32], strides = [1, 1]} : vector<8x128xf32> to vector<8x32xf32>
    %125 = vector.extract_strided_slice %122 {offsets = [0, 64], sizes = [8, 32], strides = [1, 1]} : vector<8x128xf32> to vector<8x32xf32>
    %126 = vector.extract_strided_slice %121 {offsets = [0, 96], sizes = [8, 32], strides = [1, 1]} : vector<8x128xf32> to vector<8x32xf32>
    %127 = arith.mulf %124, %108 : vector<8x32xf32>
    %128 = arith.mulf %123, %125 : vector<8x32xf32>
    %129 = arith.addf %127, %128 : vector<8x32xf32>
    %130 = math.tanh %129 : vector<8x32xf32>
    %131 = arith.mulf %126, %130 : vector<8x32xf32>
    %c6_i32 = arith.constant 6 : i32
    %132 = arith.index_cast %c6_i32 : i32 to index
    %c0_30 = arith.constant 0 : index
    %c0_31 = arith.constant 0 : index
    %133 = vector.load %arg2[%132, %c0_30, %c0_31] : memref<8x8x128xf32, #tpu.memory_space<vmem>>, vector<1x8x128xf32>
    %134 = vector.shape_cast %133 : vector<1x8x128xf32> to vector<8x128xf32>
    %135 = arith.truncf %131 : vector<8x32xf32> to vector<8x32xbf16>
    %cst_32 = arith.constant dense<0.000000e+00> : vector<8x128xf32>
    %136 = tpu.matmul %135, %3, %cst_32 {dimension_numbers = #tpu.dot_dimension_numbers<[1], [0], [0], [1], [0, 0, 1, 1], [], []>} : vector<8x32xbf16>, vector<32x128xbf16>, vector<8x128xf32> -> vector<8x128xf32>
    %137 = arith.addf %134, %136 : vector<8x128xf32>
    %138 = arith.negf %137 : vector<8x128xf32>
    %139 = math.exp %138 : vector<8x128xf32>
    %cst_33 = arith.constant 1.000000e+00 : f32
    %140 = vector.broadcast %cst_33 : f32 to vector<8x128xf32>
    %141 = arith.addf %140, %139 : vector<8x128xf32>
    %142 = arith.divf %140, %141 : vector<8x128xf32>
    %143 = math.tanh %137 : vector<8x128xf32>
    %144 = vector.extract_strided_slice %142 {offsets = [0, 0], sizes = [8, 32], strides = [1, 1]} : vector<8x128xf32> to vector<8x32xf32>
    %145 = vector.extract_strided_slice %142 {offsets = [0, 32], sizes = [8, 32], strides = [1, 1]} : vector<8x128xf32> to vector<8x32xf32>
    %146 = vector.extract_strided_slice %143 {offsets = [0, 64], sizes = [8, 32], strides = [1, 1]} : vector<8x128xf32> to vector<8x32xf32>
    %147 = vector.extract_strided_slice %142 {offsets = [0, 96], sizes = [8, 32], strides = [1, 1]} : vector<8x128xf32> to vector<8x32xf32>
    %148 = arith.mulf %145, %129 : vector<8x32xf32>
    %149 = arith.mulf %144, %146 : vector<8x32xf32>
    %150 = arith.addf %148, %149 : vector<8x32xf32>
    %151 = math.tanh %150 : vector<8x32xf32>
    %152 = arith.mulf %147, %151 : vector<8x32xf32>
    %c7_i32 = arith.constant 7 : i32
    %153 = arith.index_cast %c7_i32 : i32 to index
    %c0_34 = arith.constant 0 : index
    %c0_35 = arith.constant 0 : index
    %154 = vector.load %arg2[%153, %c0_34, %c0_35] : memref<8x8x128xf32, #tpu.memory_space<vmem>>, vector<1x8x128xf32>
    %155 = vector.shape_cast %154 : vector<1x8x128xf32> to vector<8x128xf32>
    %156 = arith.truncf %152 : vector<8x32xf32> to vector<8x32xbf16>
    %cst_36 = arith.constant dense<0.000000e+00> : vector<8x128xf32>
    %157 = tpu.matmul %156, %3, %cst_36 {dimension_numbers = #tpu.dot_dimension_numbers<[1], [0], [0], [1], [0, 0, 1, 1], [], []>} : vector<8x32xbf16>, vector<32x128xbf16>, vector<8x128xf32> -> vector<8x128xf32>
    %158 = arith.addf %155, %157 : vector<8x128xf32>
    %159 = arith.negf %158 : vector<8x128xf32>
    %160 = math.exp %159 : vector<8x128xf32>
    %cst_37 = arith.constant 1.000000e+00 : f32
    %161 = vector.broadcast %cst_37 : f32 to vector<8x128xf32>
    %162 = arith.addf %161, %160 : vector<8x128xf32>
    %163 = arith.divf %161, %162 : vector<8x128xf32>
    %164 = math.tanh %158 : vector<8x128xf32>
    %165 = vector.extract_strided_slice %163 {offsets = [0, 0], sizes = [8, 32], strides = [1, 1]} : vector<8x128xf32> to vector<8x32xf32>
    %166 = vector.extract_strided_slice %163 {offsets = [0, 32], sizes = [8, 32], strides = [1, 1]} : vector<8x128xf32> to vector<8x32xf32>
    %167 = vector.extract_strided_slice %164 {offsets = [0, 64], sizes = [8, 32], strides = [1, 1]} : vector<8x128xf32> to vector<8x32xf32>
    %168 = vector.extract_strided_slice %163 {offsets = [0, 96], sizes = [8, 32], strides = [1, 1]} : vector<8x128xf32> to vector<8x32xf32>
    %169 = arith.mulf %166, %150 : vector<8x32xf32>
    %170 = arith.mulf %165, %167 : vector<8x32xf32>
    %171 = arith.addf %169, %170 : vector<8x32xf32>
    %172 = math.tanh %171 : vector<8x32xf32>
    %173 = arith.mulf %168, %172 : vector<8x32xf32>
    %c8_i32 = arith.constant 8 : i32
    %c0_38 = arith.constant 0 : index
    %c0_39 = arith.constant 0 : index
    %174 = vector.load %arg7[%c0_38, %c0_39] : memref<8x32xf32, #tpu.memory_space<vmem>>, vector<8x32xf32>
    tpu.vector_store %arg7[%c0_38, %c0_39], %173 {strides = array<i32>} : memref<8x32xf32, #tpu.memory_space<vmem>>, vector<8x32xf32>,
    %c0_40 = arith.constant 0 : index
    %c0_41 = arith.constant 0 : index
    %175 = vector.load %arg8[%c0_40, %c0_41] : memref<8x32xf32, #tpu.memory_space<vmem>>, vector<8x32xf32>
    tpu.vector_store %arg8[%c0_40, %c0_41], %171 {strides = array<i32>} : memref<8x32xf32, #tpu.memory_space<vmem>>, vector<8x32xf32>,
    %c0_i32_42 = arith.constant 0 : i32
    %176 = arith.cmpi eq, %arg1, %c0_i32_42 : i32
    %177 = arith.extui %176 : i1 to i32
    %c0_i32_43 = arith.constant 0 : i32
    %178 = arith.cmpi ne, %177, %c0_i32_43 : i32
    scf.if %178 {
      %179 = arith.truncf %173 : vector<8x32xf32> to vector<8x32xbf16>
      %c0_44 = arith.constant 0 : index
      %c0_45 = arith.constant 0 : index
      %180 = vector.load %arg4[%c0_44, %c0_45] : memref<32x128xbf16, #tpu.memory_space<vmem>>, vector<32x128xbf16>
      %cst_46 = arith.constant dense<0.000000e+00> : vector<8x128xf32>
      %181 = tpu.matmul %179, %180, %cst_46 {dimension_numbers = #tpu.dot_dimension_numbers<[1], [0], [0], [1], [0, 0, 1, 1], [], []>} : vector<8x32xbf16>, vector<32x128xbf16>, vector<8x128xf32> -> vector<8x128xf32>
      %c0_47 = arith.constant 0 : index
      %c0_48 = arith.constant 0 : index
      %182 = vector.load %arg5[%c0_47, %c0_48] : memref<1x128xf32, #tpu.memory_space<vmem>>, vector<1x128xf32>
      %183 = vector.broadcast %182 : vector<1x128xf32> to vector<8x128xf32>
      %184 = arith.addf %181, %183 : vector<8x128xf32>
      %c0_49 = arith.constant 0 : index
      %c0_50 = arith.constant 0 : index
      %185 = vector.load %arg6[%c0_49, %c0_50] : memref<8x128xf32, #tpu.memory_space<vmem>>, vector<8x128xf32>
      tpu.vector_store %arg6[%c0_49, %c0_50], %184 {strides = array<i32>} : memref<8x128xf32, #tpu.memory_space<vmem>>, vector<8x128xf32>,
    } else {
    }
    return
  }
  func.func @transform_0(%arg0: i32, %arg1: i32) -> (i32, i32, i32) {
    %c0_i32 = arith.constant 0 : i32
    %c0_i32_0 = arith.constant 0 : i32
    return %arg1, %arg0, %c0_i32 : i32, i32, i32
  }
  func.func @transform_1(%arg0: i32, %arg1: i32) -> (i32, i32) {
    %c0_i32 = arith.constant 0 : i32
    %c0_i32_0 = arith.constant 0 : i32
    %c0_i32_1 = arith.constant 0 : i32
    return %c0_i32, %c0_i32_0 : i32, i32
  }
  func.func @transform_2(%arg0: i32, %arg1: i32) -> (i32, i32) {
    %c0_i32 = arith.constant 0 : i32
    %c0_i32_0 = arith.constant 0 : i32
    %c0_i32_1 = arith.constant 0 : i32
    return %c0_i32, %c0_i32_0 : i32, i32
  }
  func.func @transform_3(%arg0: i32, %arg1: i32) -> (i32, i32) {
    %c0_i32 = arith.constant 0 : i32
    %c0_i32_0 = arith.constant 0 : i32
    %c0_i32_1 = arith.constant 0 : i32
    return %c0_i32, %c0_i32_0 : i32, i32
  }
  func.func @transform_4(%arg0: i32, %arg1: i32) -> (i32, i32) {
    %c0_i32 = arith.constant 0 : i32
    %c0_i32_0 = arith.constant 0 : i32
    return %arg0, %c0_i32 : i32, i32
  }
}

</mosaic_0001>

<llo_original>
// kernel: lstm_model_forward.1
$region0: #{lstm_model_forward.1}
  #allocation0 [shape = 'u32[]', space=smem, size = 0x4, offset = 0x4, fixed_abs, tag = 'smem constant byte address 0x4 - core index']
  #allocation1 [shape = 'u32[144,128]{1,0:T(1,128)}', space=vmem, size = 0x12000, scoped, tag = 'internal scratch']
  #allocation2 [shape = 'f32[8,32]{1,0:T(8,128)}', space=vmem, size = 0x1000, scoped, tag = 'scratch operand']
  #allocation3 [shape = 'f32[8,32]{1,0:T(8,128)}', space=vmem, size = 0x1000, scoped, tag = 'scratch operand']
  %s0 = inlined_call_operand.vmem [shape: f32[8,8,128], index: 0, kind: input, shape index: {}]
  %s1 = inlined_call_operand.vmem [shape: bf16[32,128], index: 1, kind: input, shape index: {}]
  %s2 = inlined_call_operand.vmem [shape: bf16[32,128], index: 2, kind: input, shape index: {}]
  %s3 = inlined_call_operand.vmem [shape: f32[1,128], index: 3, kind: input, shape index: {}]
  %s4 = inlined_call_operand.vmem [shape: f32[8,128], index: 4, kind: output, shape index: {}]
  %s5 = sld [smem:[#allocation0]]
  $region34: #{lstm_model_forward.1} parent=0
    _
  %s7 = ssub.s32 1, %s5
  %s8 = scalar_select 0, %s7, %s5
  // Predicated region
  $region2: #{lstm_model_forward.1} parent=0 // pred_check
    _
  $region3: #{lstm_model_forward.1} parent=0 // pred_check_branch
    %10 = sbr.rel (0) target = $region5
  $region4: #{lstm_model_forward.1} parent=0 // pred_region
    _
  $region5: #{lstm_model_forward.1} parent=0 // pred_fallthru
    _
  // Predicated region
  $region6: #{lstm_model_forward.1} parent=0 // pred_check
    _
  $region7: #{lstm_model_forward.1} parent=0 // pred_check_branch
    %12 = sbr.rel (0) target = $region9
  $region8: #{lstm_model_forward.1} parent=0 // pred_region
    _
  $region9: #{lstm_model_forward.1} parent=0 // pred_fallthru
    _
  // Predicated region
  $region10: #{lstm_model_forward.1} parent=0 // pred_check
    _
  $region11: #{lstm_model_forward.1} parent=0 // pred_check_branch
    %14 = sbr.rel (0) target = $region13
  $region12: #{lstm_model_forward.1} parent=0 // pred_region
    _
  $region13: #{lstm_model_forward.1} parent=0 // pred_fallthru
    _
  // Predicated region
  $region14: #{lstm_model_forward.1} parent=0 // pred_check
    _
  $region15: #{lstm_model_forward.1} parent=0 // pred_check_branch
    %16 = sbr.rel (0) target = $region17
  $region16: #{lstm_model_forward.1} parent=0 // pred_region
    _
  $region17: #{lstm_model_forward.1} parent=0 // pred_fallthru
    _
  %p18 = scmp.eq.s32.totalorder 0, 0
  // Predicated region
  $region18: #{lstm_model_forward.1} parent=0 // pred_check
    %p19 = pneg %p18
  $region19: #{lstm_model_forward.1} parent=0 // pred_check_branch
    %21 = sbr.rel (%p19) target = $region21
  $region20: #{lstm_model_forward.1} parent=0 // pred_region
    %vm22 = vcmask 261120
    %23 = vst.msk [vmem:[#allocation2] sm:$0xff] %vm22, 0.0
    %24 = vst.msk [vmem:[#allocation3] sm:$0xff] %vm22, 0.0
  $region21: #{lstm_model_forward.1} parent=0 // pred_fallthru
    _
  %v25 = vld [vmem:[%s1] sm:$0xf]
  %v26 = vld [vmem:[%s1 + $0x4] sm:$0xf]
  %v27 = vld [vmem:[%s1 + $0x8] sm:$0xf]
  %v28 = vld [vmem:[%s1 + $0xc] sm:$0xf]
  %v29 = vld [vmem:[#allocation2] sm:$0xff]
  %v30 = vld [vmem:[#allocation3] sm:$0xff]
  %v31 = vld [vmem:[%s0] sm:$0xff]
  %v32 = vpack.c.bf16 %v29, %v29
  %v37 = vunpack.c.l.b16 %v25
  %v38 = vunpack.c.l.b16 %v26
  %v39 = vunpack.c.l.b16 %v27
  %v40 = vunpack.c.l.b16 %v28
  %v41 = vpack.c.b16 %v38, %v37
  %v42 = vpack.c.b16 %v40, %v39
  %vm45 = vcmask 261120
  %v47 = vsel %vm45, %v32, 0
  %49 = vmatprep.subr.bf16.mxu0 0
  %50 = vmatpush1.bf16.msra.mxu0 0
  %51 = vmatprep.subr.bf16.mxu0 0
  %52 = vmatpush1.bf16.msra.mxu0 0
  %53 = vmatprep.subr.bf16.mxu0 0
  %54 = vmatpush1.bf16.msra.mxu0 0
  %55 = vmatprep.subr.bf16.mxu0 0
  %56 = vmatpush1.bf16.msra.mxu0 0
  %57 = vmatprep.subr.bf16.mxu0 0
  %58 = vmatpush1.bf16.msra.mxu0 0
  %59 = vmatprep.subr.bf16.mxu0 0
  %60 = vmatpush1.bf16.msra.mxu0 0
  %61 = vmatprep.subr.bf16.mxu0 0
  %62 = vmatpush1.bf16.msra.mxu0 %v42
  %63 = vmatprep.subr.bf16.mxu0 0
  %64 = vmatpush1.bf16.msra.mxu0 %v41
  %65 = vmatprep.subr.bf16.mxu0 0
  %66 = vmatpush2.bf16.msra.mxu0 0
  %67 = vmatprep.subr.bf16.mxu0 0
  %68 = vmatpush2.bf16.msra.mxu0 0
  %69 = vmatprep.subr.bf16.mxu0 0
  %70 = vmatpush2.bf16.msra.mxu0 0
  %71 = vmatprep.subr.bf16.mxu0 0
  %72 = vmatpush2.bf16.msra.mxu0 0
  %73 = vmatprep.subr.bf16.mxu0 0
  %74 = vmatpush2.bf16.msra.mxu0 0
  %75 = vmatprep.subr.bf16.mxu0 0
  %76 = vmatpush2.bf16.msra.mxu0 0
  %77 = vmatprep.subr.bf16.mxu0 0
  %78 = vmatpush2.bf16.msra.mxu0 0
  %79 = vmatprep.subr.bf16.mxu0 0
  %80 = vmatpush2.bf16.msra.mxu0 0
  %81 = vmatprep.mubr.bf16.mxu0 0
  %82 = vmatmul.mubr.bf16.gmra.mxu0 %v47
  %v83 = vpop.f32.mrf.mxu0
  %v84 = vadd.f32 0.0, %v83
  %v85 = vpop.f32.mrf.mxu0
  %v86 = vpop.f32.mrf.mxu0
  %v87 = vpop.f32.mrf.mxu0
  %88 = vdwg.mxu0
  %v89 = vadd.f32 %v31, %v84
  %v90 = vxor.u32 %v89, 2147483648
  %v91 = vmul.f32 %v90, 1.442695
  %v92 = vpow.pop %v91
  %v93 = vadd.f32 %v92, 1.0
  %v94 = vrcp.pop %v93
  %v95 = vmul.f32 1.0, %v94
  %v96 = vtanh.pop %v89
  %98 = vrot.lane.b32.xlu0 %v30, 32
  %v99 = vpop.permute.xlu0 %98
  %v101 = vmul.f32 %v95, %v99
  %103 = vrot.lane.b32.xlu0 %v96, 64
  %v104 = vpop.permute.xlu0 %103
  %v106 = vmul.f32 %v95, %v104
  %108 = vrot.lane.b32.xlu0 %v106, 32
  %v109 = vpop.permute.xlu0 %108
  %v111 = vadd.f32 %v101, %v109
  %v112 = vtanh.pop %v111
  %114 = vrot.lane.b32.xlu0 %v112, 64
  %v115 = vpop.permute.xlu0 %114
  %v117 = vmul.f32 %v95, %v115
  %s118 = scalar_lea.vmem %s0, 8
  %v119 = vld [vmem:[%s118] sm:$0xff]
  %v120 = vpack.c.bf16 %v117, %v117
  %122 = vrot.lane.b32.xlu0 %v120, 32
  %v123 = vpop.permute.xlu0 %122
  %v125 = vsel %vm45, %v123, 0
  %127 = vmatprep.subr.bf16.mxu0 0
  %128 = vmatpush1.bf16.msra.mxu0 0
  %129 = vmatprep.subr.bf16.mxu0 0
  %130 = vmatpush1.bf16.msra.mxu0 0
  %131 = vmatprep.subr.bf16.mxu0 0
  %132 = vmatpush1.bf16.msra.mxu0 0
  %133 = vmatprep.subr.bf16.mxu0 0
  %134 = vmatpush1.bf16.msra.mxu0 0
  %135 = vmatprep.subr.bf16.mxu0 0
  %136 = vmatpush1.bf16.msra.mxu0 0
  %137 = vmatprep.subr.bf16.mxu0 0
  %138 = vmatpush1.bf16.msra.mxu0 0
  %139 = vmatprep.subr.bf16.mxu0 0
  %140 = vmatpush1.bf16.msra.mxu0 %v42
  %141 = vmatprep.subr.bf16.mxu0 0
  %142 = vmatpush1.bf16.msra.mxu0 %v41
  %143 = vmatprep.subr.bf16.mxu0 0
  %144 = vmatpush2.bf16.msra.mxu0 0
  %145 = vmatprep.subr.bf16.mxu0 0
  %146 = vmatpush2.bf16.msra.mxu0 0
  %147 = vmatprep.subr.bf16.mxu0 0
  %148 = vmatpush2.bf16.msra.mxu0 0
  %149 = vmatprep.subr.bf16.mxu0 0
  %150 = vmatpush2.bf16.msra.mxu0 0
  %151 = vmatprep.subr.bf16.mxu0 0
  %152 = vmatpush2.bf16.msra.mxu0 0
  %153 = vmatprep.subr.bf16.mxu0 0
  %154 = vmatpush2.bf16.msra.mxu0 0
  %155 = vmatprep.subr.bf16.mxu0 0
  %156 = vmatpush2.bf16.msra.mxu0 0
  %157 = vmatprep.subr.bf16.mxu0 0
  %158 = vmatpush2.bf16.msra.mxu0 0
  %159 = vmatprep.mubr.bf16.mxu0 0
  %160 = vmatmul.mubr.bf16.gmra.mxu0 %v125
  %v161 = vpop.f32.mrf.mxu0
  %v162 = vadd.f32 0.0, %v161
  %v163 = vpop.f32.mrf.mxu0
  %v164 = vpop.f32.mrf.mxu0
  %v165 = vpop.f32.mrf.mxu0
  %166 = vdwg.mxu0
  %v167 = vadd.f32 %v119, %v162
  %v168 = vxor.u32 %v167, 2147483648
  %v169 = vmul.f32 %v168, 1.442695
  %v170 = vpow.pop %v169
  %v171 = vadd.f32 %v170, 1.0
  %v172 = vrcp.pop %v171
  %v173 = vmul.f32 1.0, %v172
  %v174 = vtanh.pop %v167
  %v175 = vmul.f32 %v173, %v111
  %177 = vrot.lane.b32.xlu0 %v174, 64
  %v178 = vpop.permute.xlu0 %177
  %v180 = vmul.f32 %v173, %v178
  %182 = vrot.lane.b32.xlu0 %v180, 32
  %v183 = vpop.permute.xlu0 %182
  %v185 = vadd.f32 %v175, %v183
  %v186 = vtanh.pop %v185
  %188 = vrot.lane.b32.xlu0 %v186, 64
  %v189 = vpop.permute.xlu0 %188
  %v191 = vmul.f32 %v173, %v189
  %s192 = scalar_lea.vmem %s0, 16
  %v193 = vld [vmem:[%s192] sm:$0xff]
  %v194 = vpack.c.bf16 %v191, %v191
  %196 = vrot.lane.b32.xlu0 %v194, 32
  %v197 = vpop.permute.xlu0 %196
  %v199 = vsel %vm45, %v197, 0
  %201 = vmatprep.subr.bf16.mxu0 0
  %202 = vmatpush1.bf16.msra.mxu0 0
  %203 = vmatprep.subr.bf16.mxu0 0
  %204 = vmatpush1.bf16.msra.mxu0 0
  %205 = vmatprep.subr.bf16.mxu0 0
  %206 = vmatpush1.bf16.msra.mxu0 0
  %207 = vmatprep.subr.bf16.mxu0 0
  %208 = vmatpush1.bf16.msra.mxu0 0
  %209 = vmatprep.subr.bf16.mxu0 0
  %210 = vmatpush1.bf16.msra.mxu0 0
  %211 = vmatprep.subr.bf16.mxu0 0
  %212 = vmatpush1.bf16.msra.mxu0 0
  %213 = vmatprep.subr.bf16.mxu0 0
  %214 = vmatpush1.bf16.msra.mxu0 %v42
  %215 = vmatprep.subr.bf16.mxu0 0
  %216 = vmatpush1.bf16.msra.mxu0 %v41
  %217 = vmatprep.subr.bf16.mxu0 0
  %218 = vmatpush2.bf16.msra.mxu0 0
  %219 = vmatprep.subr.bf16.mxu0 0
  %220 = vmatpush2.bf16.msra.mxu0 0
  %221 = vmatprep.subr.bf16.mxu0 0
  %222 = vmatpush2.bf16.msra.mxu0 0
  %223 = vmatprep.subr.bf16.mxu0 0
  %224 = vmatpush2.bf16.msra.mxu0 0
  %225 = vmatprep.subr.bf16.mxu0 0
  %226 = vmatpush2.bf16.msra.mxu0 0
  %227 = vmatprep.subr.bf16.mxu0 0
  %228 = vmatpush2.bf16.msra.mxu0 0
  %229 = vmatprep.subr.bf16.mxu0 0
  %230 = vmatpush2.bf16.msra.mxu0 0
  %231 = vmatprep.subr.bf16.mxu0 0
  %232 = vmatpush2.bf16.msra.mxu0 0
  %233 = vmatprep.mubr.bf16.mxu0 0
  %234 = vmatmul.mubr.bf16.gmra.mxu0 %v199
  %v235 = vpop.f32.mrf.mxu0
  %v236 = vadd.f32 0.0, %v235
  %v237 = vpop.f32.mrf.mxu0
  %v238 = vpop.f32.mrf.mxu0
  %v239 = vpop.f32.mrf.mxu0
  %240 = vdwg.mxu0
  %v241 = vadd.f32 %v193, %v236
  %v242 = vxor.u32 %v241, 2147483648
  %v243 = vmul.f32 %v242, 1.442695
  %v244 = vpow.pop %v243
  %v245 = vadd.f32 %v244, 1.0
  %v246 = vrcp.pop %v245
  %v247 = vmul.f32 1.0, %v246
  %v248 = vtanh.pop %v241
  %v249 = vmul.f32 %v247, %v185
  %251 = vrot.lane.b32.xlu0 %v248, 64
  %v252 = vpop.permute.xlu0 %251
  %v254 = vmul.f32 %v247, %v252
  %256 = vrot.lane.b32.xlu0 %v254, 32
  %v257 = vpop.permute.xlu0 %256
  %v259 = vadd.f32 %v249, %v257
  %v260 = vtanh.pop %v259
  %262 = vrot.lane.b32.xlu0 %v260, 64
  %v263 = vpop.permute.xlu0 %262
  %v265 = vmul.f32 %v247, %v263
  %s266 = scalar_lea.vmem %s0, 24
  %v267 = vld [vmem:[%s266] sm:$0xff]
  %v268 = vpack.c.bf16 %v265, %v265
  %270 = vrot.lane.b32.xlu0 %v268, 32
  %v271 = vpop.permute.xlu0 %270
  %v273 = vsel %vm45, %v271, 0
  %275 = vmatprep.subr.bf16.mxu0 0
  %276 = vmatpush1.bf16.msra.mxu0 0
  %277 = vmatprep.subr.bf16.mxu0 0
  %278 = vmatpush1.bf16.msra.mxu0 0
  %279 = vmatprep.subr.bf16.mxu0 0
  %280 = vmatpush1.bf16.msra.mxu0 0
  %281 = vmatprep.subr.bf16.mxu0 0
  %282 = vmatpush1.bf16.msra.mxu0 0
  %283 = vmatprep.subr.bf16.mxu0 0
  %284 = vmatpush1.bf16.msra.mxu0 0
  %285 = vmatprep.subr.bf16.mxu0 0
  %286 = vmatpush1.bf16.msra.mxu0 0
  %287 = vmatprep.subr.bf16.mxu0 0
  %288 = vmatpush1.bf16.msra.mxu0 %v42
  %289 = vmatprep.subr.bf16.mxu0 0
  %290 = vmatpush1.bf16.msra.mxu0 %v41
  %291 = vmatprep.subr.bf16.mxu0 0
  %292 = vmatpush2.bf16.msra.mxu0 0
  %293 = vmatprep.subr.bf16.mxu0 0
  %294 = vmatpush2.bf16.msra.mxu0 0
  %295 = vmatprep.subr.bf16.mxu0 0
  %296 = vmatpush2.bf16.msra.mxu0 0
  %297 = vmatprep.subr.bf16.mxu0 0
  %298 = vmatpush2.bf16.msra.mxu0 0
  %299 = vmatprep.subr.bf16.mxu0 0
  %300 = vmatpush2.bf16.msra.mxu0 0
  %301 = vmatprep.subr.bf16.mxu0 0
  %302 = vmatpush2.bf16.msra.mxu0 0
  %303 = vmatprep.subr.bf16.mxu0 0
  %304 = vmatpush2.bf16.msra.mxu0 0
  %305 = vmatprep.subr.bf16.mxu0 0
  %306 = vmatpush2.bf16.msra.mxu0 0
  %307 = vmatprep.mubr.bf16.mxu0 0
  %308 = vmatmul.mubr.bf16.gmra.mxu0 %v273
  %v309 = vpop.f32.mrf.mxu0
  %v310 = vadd.f32 0.0, %v309
  %v311 = vpop.f32.mrf.mxu0
  %v312 = vpop.f32.mrf.mxu0
  %v313 = vpop.f32.mrf.mxu0
  %314 = vdwg.mxu0
  %v315 = vadd.f32 %v267, %v310
  %v316 = vxor.u32 %v315, 2147483648
  %v317 = vmul.f32 %v316, 1.442695
  %v318 = vpow.pop %v317
  %v319 = vadd.f32 %v318, 1.0
  %v320 = vrcp.pop %v319
  %v321 = vmul.f32 1.0, %v320
  %v322 = vtanh.pop %v315
  %v323 = vmul.f32 %v321, %v259
  %325 = vrot.lane.b32.xlu0 %v322, 64
  %v326 = vpop.permute.xlu0 %325
  %v328 = vmul.f32 %v321, %v326
  %330 = vrot.lane.b32.xlu0 %v328, 32
  %v331 = vpop.permute.xlu0 %330
  %v333 = vadd.f32 %v323, %v331
  %v334 = vtanh.pop %v333
  %336 = vrot.lane.b32.xlu0 %v334, 64
  %v337 = vpop.permute.xlu0 %336
  %v339 = vmul.f32 %v321, %v337
  %s340 = scalar_lea.vmem %s0, 32
  %v341 = vld [vmem:[%s340] sm:$0xff]
  %v342 = vpack.c.bf16 %v339, %v339
  %344 = vrot.lane.b32.xlu0 %v342, 32
  %v345 = vpop.permute.xlu0 %344
  %v347 = vsel %vm45, %v345, 0
  %349 = vmatprep.subr.bf16.mxu0 0
  %350 = vmatpush1.bf16.msra.mxu0 0
  %351 = vmatprep.subr.bf16.mxu0 0
  %352 = vmatpush1.bf16.msra.mxu0 0
  %353 = vmatprep.subr.bf16.mxu0 0
  %354 = vmatpush1.bf16.msra.mxu0 0
  %355 = vmatprep.subr.bf16.mxu0 0
  %356 = vmatpush1.bf16.msra.mxu0 0
  %357 = vmatprep.subr.bf16.mxu0 0
  %358 = vmatpush1.bf16.msra.mxu0 0
  %359 = vmatprep.subr.bf16.mxu0 0
  %360 = vmatpush1.bf16.msra.mxu0 0
  %361 = vmatprep.subr.bf16.mxu0 0
  %362 = vmatpush1.bf16.msra.mxu0 %v42
  %363 = vmatprep.subr.bf16.mxu0 0
  %364 = vmatpush1.bf16.msra.mxu0 %v41
  %365 = vmatprep.subr.bf16.mxu0 0
  %366 = vmatpush2.bf16.msra.mxu0 0
  %367 = vmatprep.subr.bf16.mxu0 0
  %368 = vmatpush2.bf16.msra.mxu0 0
  %369 = vmatprep.subr.bf16.mxu0 0
  %370 = vmatpush2.bf16.msra.mxu0 0
  %371 = vmatprep.subr.bf16.mxu0 0
  %372 = vmatpush2.bf16.msra.mxu0 0
  %373 = vmatprep.subr.bf16.mxu0 0
  %374 = vmatpush2.bf16.msra.mxu0 0
  %375 = vmatprep.subr.bf16.mxu0 0
  %376 = vmatpush2.bf16.msra.mxu0 0
  %377 = vmatprep.subr.bf16.mxu0 0
  %378 = vmatpush2.bf16.msra.mxu0 0
  %379 = vmatprep.subr.bf16.mxu0 0
  %380 = vmatpush2.bf16.msra.mxu0 0
  %381 = vmatprep.mubr.bf16.mxu0 0
  %382 = vmatmul.mubr.bf16.gmra.mxu0 %v347
  %v383 = vpop.f32.mrf.mxu0
  %v384 = vadd.f32 0.0, %v383
  %v385 = vpop.f32.mrf.mxu0
  %v386 = vpop.f32.mrf.mxu0
  %v387 = vpop.f32.mrf.mxu0
  %388 = vdwg.mxu0
  %v389 = vadd.f32 %v341, %v384
  %v390 = vxor.u32 %v389, 2147483648
  %v391 = vmul.f32 %v390, 1.442695
  %v392 = vpow.pop %v391
  %v393 = vadd.f32 %v392, 1.0
  %v394 = vrcp.pop %v393
  %v395 = vmul.f32 1.0, %v394
  %v396 = vtanh.pop %v389
  %v397 = vmul.f32 %v395, %v333
  %399 = vrot.lane.b32.xlu0 %v396, 64
  %v400 = vpop.permute.xlu0 %399
  %v402 = vmul.f32 %v395, %v400
  %404 = vrot.lane.b32.xlu0 %v402, 32
  %v405 = vpop.permute.xlu0 %404
  %v407 = vadd.f32 %v397, %v405
  %v408 = vtanh.pop %v407
  %410 = vrot.lane.b32.xlu0 %v408, 64
  %v411 = vpop.permute.xlu0 %410
  %v413 = vmul.f32 %v395, %v411
  %s414 = scalar_lea.vmem %s0, 40
  %v415 = vld [vmem:[%s414] sm:$0xff]
  %v416 = vpack.c.bf16 %v413, %v413
  %418 = vrot.lane.b32.xlu0 %v416, 32
  %v419 = vpop.permute.xlu0 %418
  %v421 = vsel %vm45, %v419, 0
  %423 = vmatprep.subr.bf16.mxu0 0
  %424 = vmatpush1.bf16.msra.mxu0 0
  %425 = vmatprep.subr.bf16.mxu0 0
  %426 = vmatpush1.bf16.msra.mxu0 0
  %427 = vmatprep.subr.bf16.mxu0 0
  %428 = vmatpush1.bf16.msra.mxu0 0
  %429 = vmatprep.subr.bf16.mxu0 0
  %430 = vmatpush1.bf16.msra.mxu0 0
  %431 = vmatprep.subr.bf16.mxu0 0
  %432 = vmatpush1.bf16.msra.mxu0 0
  %433 = vmatprep.subr.bf16.mxu0 0
  %434 = vmatpush1.bf16.msra.mxu0 0
  %435 = vmatprep.subr.bf16.mxu0 0
  %436 = vmatpush1.bf16.msra.mxu0 %v42
  %437 = vmatprep.subr.bf16.mxu0 0
  %438 = vmatpush1.bf16.msra.mxu0 %v41
  %439 = vmatprep.subr.bf16.mxu0 0
  %440 = vmatpush2.bf16.msra.mxu0 0
  %441 = vmatprep.subr.bf16.mxu0 0
  %442 = vmatpush2.bf16.msra.mxu0 0
  %443 = vmatprep.subr.bf16.mxu0 0
  %444 = vmatpush2.bf16.msra.mxu0 0
  %445 = vmatprep.subr.bf16.mxu0 0
  %446 = vmatpush2.bf16.msra.mxu0 0
  %447 = vmatprep.subr.bf16.mxu0 0
  %448 = vmatpush2.bf16.msra.mxu0 0
  %449 = vmatprep.subr.bf16.mxu0 0
  %450 = vmatpush2.bf16.msra.mxu0 0
  %451 = vmatprep.subr.bf16.mxu0 0
  %452 = vmatpush2.bf16.msra.mxu0 0
  %453 = vmatprep.subr.bf16.mxu0 0
  %454 = vmatpush2.bf16.msra.mxu0 0
  %455 = vmatprep.mubr.bf16.mxu0 0
  %456 = vmatmul.mubr.bf16.gmra.mxu0 %v421
  %v457 = vpop.f32.mrf.mxu0
  %v458 = vadd.f32 0.0, %v457
  %v459 = vpop.f32.mrf.mxu0
  %v460 = vpop.f32.mrf.mxu0
  %v461 = vpop.f32.mrf.mxu0
  %462 = vdwg.mxu0
  %v463 = vadd.f32 %v415, %v458
  %v464 = vxor.u32 %v463, 2147483648
  %v465 = vmul.f32 %v464, 1.442695
  %v466 = vpow.pop %v465
  %v467 = vadd.f32 %v466, 1.0
  %v468 = vrcp.pop %v467
  %v469 = vmul.f32 1.0, %v468
  %v470 = vtanh.pop %v463
  %v471 = vmul.f32 %v469, %v407
  %473 = vrot.lane.b32.xlu0 %v470, 64
  %v474 = vpop.permute.xlu0 %473
  %v476 = vmul.f32 %v469, %v474
  %478 = vrot.lane.b32.xlu0 %v476, 32
  %v479 = vpop.permute.xlu0 %478
  %v481 = vadd.f32 %v471, %v479
  %v482 = vtanh.pop %v481
  %484 = vrot.lane.b32.xlu0 %v482, 64
  %v485 = vpop.permute.xlu0 %484
  %v487 = vmul.f32 %v469, %v485
  %s488 = scalar_lea.vmem %s0, 48
  %v489 = vld [vmem:[%s488] sm:$0xff]
  %v490 = vpack.c.bf16 %v487, %v487
  %492 = vrot.lane.b32.xlu0 %v490, 32
  %v493 = vpop.permute.xlu0 %492
  %v495 = vsel %vm45, %v493, 0
  %497 = vmatprep.subr.bf16.mxu0 0
  %498 = vmatpush1.bf16.msra.mxu0 0
  %499 = vmatprep.subr.bf16.mxu0 0
  %500 = vmatpush1.bf16.msra.mxu0 0
  %501 = vmatprep.subr.bf16.mxu0 0
  %502 = vmatpush1.bf16.msra.mxu0 0
  %503 = vmatprep.subr.bf16.mxu0 0
  %504 = vmatpush1.bf16.msra.mxu0 0
  %505 = vmatprep.subr.bf16.mxu0 0
  %506 = vmatpush1.bf16.msra.mxu0 0
  %507 = vmatprep.subr.bf16.mxu0 0
  %508 = vmatpush1.bf16.msra.mxu0 0
  %509 = vmatprep.subr.bf16.mxu0 0
  %510 = vmatpush1.bf16.msra.mxu0 %v42
  %511 = vmatprep.subr.bf16.mxu0 0
  %512 = vmatpush1.bf16.msra.mxu0 %v41
  %513 = vmatprep.subr.bf16.mxu0 0
  %514 = vmatpush2.bf16.msra.mxu0 0
  %515 = vmatprep.subr.bf16.mxu0 0
  %516 = vmatpush2.bf16.msra.mxu0 0
  %517 = vmatprep.subr.bf16.mxu0 0
  %518 = vmatpush2.bf16.msra.mxu0 0
  %519 = vmatprep.subr.bf16.mxu0 0
  %520 = vmatpush2.bf16.msra.mxu0 0
  %521 = vmatprep.subr.bf16.mxu0 0
  %522 = vmatpush2.bf16.msra.mxu0 0
  %523 = vmatprep.subr.bf16.mxu0 0
  %524 = vmatpush2.bf16.msra.mxu0 0
  %525 = vmatprep.subr.bf16.mxu0 0
  %526 = vmatpush2.bf16.msra.mxu0 0
  %527 = vmatprep.subr.bf16.mxu0 0
  %528 = vmatpush2.bf16.msra.mxu0 0
  %529 = vmatprep.mubr.bf16.mxu0 0
  %530 = vmatmul.mubr.bf16.gmra.mxu0 %v495
  %v531 = vpop.f32.mrf.mxu0
  %v532 = vadd.f32 0.0, %v531
  %v533 = vpop.f32.mrf.mxu0
  %v534 = vpop.f32.mrf.mxu0
  %v535 = vpop.f32.mrf.mxu0
  %536 = vdwg.mxu0
  %v537 = vadd.f32 %v489, %v532
  %v538 = vxor.u32 %v537, 2147483648
  %v539 = vmul.f32 %v538, 1.442695
  %v540 = vpow.pop %v539
  %v541 = vadd.f32 %v540, 1.0
  %v542 = vrcp.pop %v541
  %v543 = vmul.f32 1.0, %v542
  %v544 = vtanh.pop %v537
  %v545 = vmul.f32 %v543, %v481
  %547 = vrot.lane.b32.xlu0 %v544, 64
  %v548 = vpop.permute.xlu0 %547
  %v550 = vmul.f32 %v543, %v548
  %552 = vrot.lane.b32.xlu0 %v550, 32
  %v553 = vpop.permute.xlu0 %552
  %v555 = vadd.f32 %v545, %v553
  %v556 = vtanh.pop %v555
  %558 = vrot.lane.b32.xlu0 %v556, 64
  %v559 = vpop.permute.xlu0 %558
  %v561 = vmul.f32 %v543, %v559
  %s562 = scalar_lea.vmem %s0, 56
  %v563 = vld [vmem:[%s562] sm:$0xff]
  %v564 = vpack.c.bf16 %v561, %v561
  %566 = vrot.lane.b32.xlu0 %v564, 32
  %v567 = vpop.permute.xlu0 %566
  %v569 = vsel %vm45, %v567, 0
  %571 = vmatprep.subr.bf16.mxu0 0
  %572 = vmatpush1.bf16.msra.mxu0 0
  %573 = vmatprep.subr.bf16.mxu0 0
  %574 = vmatpush1.bf16.msra.mxu0 0
  %575 = vmatprep.subr.bf16.mxu0 0
  %576 = vmatpush1.bf16.msra.mxu0 0
  %577 = vmatprep.subr.bf16.mxu0 0
  %578 = vmatpush1.bf16.msra.mxu0 0
  %579 = vmatprep.subr.bf16.mxu0 0
  %580 = vmatpush1.bf16.msra.mxu0 0
  %581 = vmatprep.subr.bf16.mxu0 0
  %582 = vmatpush1.bf16.msra.mxu0 0
  %583 = vmatprep.subr.bf16.mxu0 0
  %584 = vmatpush1.bf16.msra.mxu0 %v42
  %585 = vmatprep.subr.bf16.mxu0 0
  %586 = vmatpush1.bf16.msra.mxu0 %v41
  %587 = vmatprep.subr.bf16.mxu0 0
  %588 = vmatpush2.bf16.msra.mxu0 0
  %589 = vmatprep.subr.bf16.mxu0 0
  %590 = vmatpush2.bf16.msra.mxu0 0
  %591 = vmatprep.subr.bf16.mxu0 0
  %592 = vmatpush2.bf16.msra.mxu0 0
  %593 = vmatprep.subr.bf16.mxu0 0
  %594 = vmatpush2.bf16.msra.mxu0 0
  %595 = vmatprep.subr.bf16.mxu0 0
  %596 = vmatpush2.bf16.msra.mxu0 0
  %597 = vmatprep.subr.bf16.mxu0 0
  %598 = vmatpush2.bf16.msra.mxu0 0
  %599 = vmatprep.subr.bf16.mxu0 0
  %600 = vmatpush2.bf16.msra.mxu0 0
  %601 = vmatprep.subr.bf16.mxu0 0
  %602 = vmatpush2.bf16.msra.mxu0 0
  %603 = vmatprep.mubr.bf16.mxu0 0
  %604 = vmatmul.mubr.bf16.gmra.mxu0 %v569
  %v605 = vpop.f32.mrf.mxu0
  %v606 = vadd.f32 0.0, %v605
  %v607 = vpop.f32.mrf.mxu0
  %v608 = vpop.f32.mrf.mxu0
  %v609 = vpop.f32.mrf.mxu0
  %610 = vdwg.mxu0
  %v611 = vadd.f32 %v563, %v606
  %v612 = vxor.u32 %v611, 2147483648
  %v613 = vmul.f32 %v612, 1.442695
  %v614 = vpow.pop %v613
  %v615 = vadd.f32 %v614, 1.0
  %v616 = vrcp.pop %v615
  %v617 = vmul.f32 1.0, %v616
  %v618 = vtanh.pop %v611
  %v619 = vmul.f32 %v617, %v555
  %621 = vrot.lane.b32.xlu0 %v618, 64
  %v622 = vpop.permute.xlu0 %621
  %v624 = vmul.f32 %v617, %v622
  %626 = vrot.lane.b32.xlu0 %v624, 32
  %v627 = vpop.permute.xlu0 %626
  %v629 = vadd.f32 %v619, %v627
  %v630 = vtanh.pop %v629
  %632 = vrot.lane.b32.xlu0 %v630, 64
  %v633 = vpop.permute.xlu0 %632
  %v635 = vmul.f32 %v617, %v633
  %637 = vrot.lane.b32.xlu0 %v635, 32
  %v638 = vpop.permute.xlu0 %637
  %640 = vst.msk [vmem:[#allocation2] sm:$0xff] %vm45, %v638
  %642 = vrot.lane.b32.xlu0 %v629, 96
  %v643 = vpop.permute.xlu0 %642
  %645 = vst.msk [vmem:[#allocation3] sm:$0xff] %vm45, %v643
  // Predicated region
  $region22: #{lstm_model_forward.1} parent=0 // pred_check
    %p646 = pneg %p18
  $region23: #{lstm_model_forward.1} parent=0 // pred_check_branch
    %648 = sbr.rel (%p646) target = $region25
  $region24: #{lstm_model_forward.1} parent=0 // pred_region
    %v649 = vpack.c.bf16 %v635, %v635
    %v650 = vld [vmem:[%s2] sm:$0xf]
    %v651 = vld [vmem:[%s2 + $0x4] sm:$0xf]
    %v652 = vld [vmem:[%s2 + $0x8] sm:$0xf]
    %v653 = vld [vmem:[%s2 + $0xc] sm:$0xf]
    %v654 = vld [vmem:[%s3] sm:$0x1]
    %v656 = vlaneseq
    %v657 = vshrl.u32 %v656, 7
    %v658 = vsub.s32 0, %v657
    %v659 = vrot.slane %v654, %v658
    %662 = vrot.lane.b32.xlu0 %v649, 32
    %v663 = vpop.permute.xlu0 %662
    %v668 = vunpack.c.l.b16 %v650
    %v669 = vunpack.c.l.b16 %v651
    %v670 = vunpack.c.l.b16 %v652
    %v671 = vunpack.c.l.b16 %v653
    %v672 = vpack.c.b16 %v669, %v668
    %v673 = vpack.c.b16 %v671, %v670
    %v677 = vsel %vm45, %v663, 0
    %679 = vmatprep.subr.bf16.mxu0 0
    %680 = vmatpush1.bf16.msra.mxu0 0
    %681 = vmatprep.subr.bf16.mxu0 0
    %682 = vmatpush1.bf16.msra.mxu0 0
    %683 = vmatprep.subr.bf16.mxu0 0
    %684 = vmatpush1.bf16.msra.mxu0 0
    %685 = vmatprep.subr.bf16.mxu0 0
    %686 = vmatpush1.bf16.msra.mxu0 0
    %687 = vmatprep.subr.bf16.mxu0 0
    %688 = vmatpush1.bf16.msra.mxu0 0
    %689 = vmatprep.subr.bf16.mxu0 0
    %690 = vmatpush1.bf16.msra.mxu0 0
    %691 = vmatprep.subr.bf16.mxu0 0
    %692 = vmatpush1.bf16.msra.mxu0 %v673
    %693 = vmatprep.subr.bf16.mxu0 0
    %694 = vmatpush1.bf16.msra.mxu0 %v672
    %695 = vmatprep.subr.bf16.mxu0 0
    %696 = vmatpush2.bf16.msra.mxu0 0
    %697 = vmatprep.subr.bf16.mxu0 0
    %698 = vmatpush2.bf16.msra.mxu0 0
    %699 = vmatprep.subr.bf16.mxu0 0
    %700 = vmatpush2.bf16.msra.mxu0 0
    %701 = vmatprep.subr.bf16.mxu0 0
    %702 = vmatpush2.bf16.msra.mxu0 0
    %703 = vmatprep.subr.bf16.mxu0 0
    %704 = vmatpush2.bf16.msra.mxu0 0
    %705 = vmatprep.subr.bf16.mxu0 0
    %706 = vmatpush2.bf16.msra.mxu0 0
    %707 = vmatprep.subr.bf16.mxu0 0
    %708 = vmatpush2.bf16.msra.mxu0 0
    %709 = vmatprep.subr.bf16.mxu0 0
    %710 = vmatpush2.bf16.msra.mxu0 0
    %711 = vmatprep.mubr.bf16.mxu0 0
    %712 = vmatmul.mubr.bf16.gmra.mxu0 %v677
    %v713 = vpop.f32.mrf.mxu0
    %v714 = vadd.f32 %v659, %v713
    %v715 = vpop.f32.mrf.mxu0
    %v716 = vpop.f32.mrf.mxu0
    %v717 = vpop.f32.mrf.mxu0
    %718 = vdwg.mxu0
    %719 = vst [vmem:[%s4] sm:$0xff] %v714
  $region25: #{lstm_model_forward.1} parent=0 // pred_fallthru
    _
  // Predicated region
  $region26: #{lstm_model_forward.1} parent=0 // pred_check
    _
  $region27: #{lstm_model_forward.1} parent=0 // pred_check_branch
    %721 = sbr.rel (0) target = $region29
  $region28: #{lstm_model_forward.1} parent=0 // pred_region
    _
  $region29: #{lstm_model_forward.1} parent=0 // pred_fallthru
    _
  // Predicated region
  $region30: #{lstm_model_forward.1} parent=0 // pred_check
    _
  $region31: #{lstm_model_forward.1} parent=0 // pred_check_branch
    %723 = sbr.rel (0) target = $region33
  $region32: #{lstm_model_forward.1} parent=0 // pred_region
    _
  $region33: #{lstm_model_forward.1} parent=0 // pred_fallthru
    _

</llo_original>
